<compile_context>
chip_gen: v7x
topology: tpu7x:2x2x1
jax: 0.10.0
libtpu: 0.0.40
codegen_flags: <defaults>
</compile_context>

<pallas_src>
import functools
import math

import jax
import jax.numpy as jnp
from jax import lax
from jax.experimental import pallas as pl
from jax.experimental.pallas import tpu as pltpu


# --------------------------------------------------------------------- roll convention

@functools.lru_cache(maxsize=None)
def _roll_sign_for_backend(backend: str) -> int:
    """Empirically pin down pltpu.roll's direction convention on this backend.

    Returns s such that
        pltpu.roll(x, (s * off) % n, axis=-1)[..., p] == x[..., (p + off) % n]
    i.e. how to express a "gather from index p+off" lane shift.
    """
    del backend  # used only as the cache key (don't share across backends)

    def probe(x_ref, o_ref):
        o_ref[...] = pltpu.roll(x_ref[...], 1, axis=1)

    with jax.ensure_compile_time_eval():   # safe even when called inside a jit trace
        x = lax.broadcasted_iota(jnp.float32, (8, 128), 1)
        y = pl.pallas_call(probe, out_shape=jax.ShapeDtypeStruct((8, 128), jnp.float32))(x)
        v = int(y[0, 0])
    if v == 127:   # numpy convention: roll(x, 1)[0] == x[-1]
        return -1
    if v == 1:     # rotate-toward-lower convention: roll(x, 1)[p] == x[p + 1]
        return 1
    raise AssertionError(f"unexpected pltpu.roll probe value: {v}")


def _roll_sign() -> int:
    return _roll_sign_for_backend(jax.default_backend())


# --------------------------------------------------------------------------- kernel

def _resblock_kernel(x_ref, w_ref, o_ref, *, C, H, W, taps, eps, compute_dtype):
    """One ResBlock per grid step; the running activation lives in the revisited o_ref.

    x_ref : (1, C, H*W)     f32   input activations (consumed at blk == 0 only)
    w_ref : (1, 2, C, 9*C)  bf16  this block's two conv weights, tap-stacked along K
    o_ref : (1, C, H*W)     f32   running activation (same output block across blk axis)
    """
    blk = pl.program_id(1)
    HW = H * W
    inv_hw = jnp.float32(1.0 / HW)

    @pl.when(blk == 0)
    def _():
        o_ref[...] = x_ref[...]

    # Zero-padding validity masks for the 9 taps (cheap iota math on (1, HW) vregs).
    pos = lax.broadcasted_iota(jnp.int32, (1, HW), 1)
    py = pos // W
    px = pos % W
    masks = []
    for (ddy, ddx, _) in taps:
        ny = py + ddy
        nx = px + ddx
        masks.append((ny >= 0) & (ny < H) & (nx >= 0) & (nx < W))   # (1, HW) bool

    def conv3x3(h, w2d):
        # 3x3 "same" conv with zero padding as ONE MXU matmul: stack the 9 lane-rolled,
        # boundary-masked taps along the contraction (sublane) axis -> (9C, HW) bf16,
        # then contract against the lane-dense (C, 9C) bf16 weight with f32 accumulate.
        hb = h.astype(compute_dtype)                         # single cast pass per conv
        parts = []
        for t, (ddy, ddx, shift) in enumerate(taps):
            if ddy == 0 and ddx == 0:
                parts.append(hb)                             # center tap: no shift/mask
            else:
                shifted = pltpu.roll(hb, shift, axis=1)      # XLU lane rotate (cheap)
                parts.append(jnp.where(masks[t], shifted, jnp.zeros((), compute_dtype)))
        stacked = jnp.concatenate(parts, axis=0)             # (9C, HW) compute_dtype
        return jnp.dot(w2d, stacked, preferred_element_type=jnp.float32)   # (C, HW) f32

    def instance_norm(h):
        # One pass: sum and sum-of-squares are independent cross-lane reductions.
        mean = jnp.sum(h, axis=1, keepdims=True) * inv_hw
        mean_sq = jnp.sum(h * h, axis=1, keepdims=True) * inv_hw
        var = mean_sq - mean * mean
        return (h - mean) * lax.rsqrt(var + eps)

    # NOTE: the conv bias is intentionally dropped: every conv is followed by an
    # affine-free InstanceNorm whose mean subtraction cancels any per-channel constant.
    x = o_ref[0]                                             # (C, HW) f32 running act
    h = jnp.maximum(instance_norm(conv3x3(x, w_ref[0, 0])), 0.0)   # conv -> IN -> ReLU
    h = instance_norm(conv3x3(h, w_ref[0, 1]))                     # conv -> IN
    o_ref[0] = x + h                                         # residual add


# --------------------------------------------------------------------------- wrapper

def init_resblocks_params(key, *, num_blocks, dim):
    """PyTorch-layout parameters: per block (w1, b1, w2, b2), w: (Cout, Cin, 3, 3)."""
    params = []
    scale = 1.0 / math.sqrt(9 * dim)
    for _ in range(num_blocks):
        block = []
        for _ in range(2):
            key, kw, kb = jax.random.split(key, 3)
            w = jax.random.normal(kw, (dim, dim, 3, 3), jnp.float32) * scale
            b = jax.random.normal(kb, (dim,), jnp.float32) * scale
            block += [w, b]
        params.append(tuple(block))
    return params


def resblocks_forward(x_nchw, params, *, eps=1e-5, compute_dtype=jnp.bfloat16):
    """Fused ResBlocks forward.  x_nchw: (N, C, H, W) f32 -> (N, C, H, W) f32."""
    N, C, H, W = x_nchw.shape
    HW = H * W
    nine_c = 9 * C
    num_blocks = len(params)
    assert C % 8 == 0, "channel count should be a multiple of 8 (sublane tiling)"
    assert HW % 128 == 0, "H*W should be a multiple of 128 (lane-dense tiling)"
    # TODO(synk): for production MUNIT sizes (dim>=256, 64x64+ maps) additionally tile
    # the pixel (lane) axis with halo handling and re-budget VMEM for v7x's 64 MiB.

    # channels -> sublanes, pixels -> lanes (lane-dense); free reshape in XLA.
    x = x_nchw.reshape(N, C, HW)

    # Per-conv weights repacked tap-major along the contraction axis (lane-dense):
    #   w2d[co, t*C + ci] = w[co, ci, ky, kx],  t = ky*3 + kx  ->  (C, 9C) bf16.
    # Conv biases are NOT passed: InstanceNorm(affine=False) cancels them exactly.
    w_blocks = []
    for (w1, _b1, w2, _b2) in params:
        w_blocks.append(jnp.stack(
            [jnp.transpose(w1, (0, 2, 3, 1)).reshape(C, nine_c),
             jnp.transpose(w2, (0, 2, 3, 1)).reshape(C, nine_c)], axis=0))
    w_all = jnp.stack(w_blocks, axis=0).astype(compute_dtype)   # (num_blocks, 2, C, 9C)

    # Flattened lane offsets of the 9 taps, expressed in pltpu.roll's convention.
    sign = _roll_sign()
    taps = tuple(
        (dy - 1, dx - 1, int((sign * ((dy - 1) * W + (dx - 1))) % HW))
        for dy in range(3) for dx in range(3))

    kernel = functools.partial(
        _resblock_kernel, C=C, H=H, W=W, taps=taps, eps=eps, compute_dtype=compute_dtype)

    itemsize = jnp.dtype(compute_dtype).itemsize
    cost = pl.CostEstimate(
        flops=2 * N * num_blocks * 2 * C * nine_c * HW,
        transcendentals=N * num_blocks * 2 * C,        # one rsqrt per (sample, norm, chan)
        bytes_accessed=2 * x.size * 4 + N * w_all.size * itemsize)

    # VMEM budget: in/out activation blocks (double-buffered) + streamed per-block
    # weights (double-buffered) + bf16/f32 working set, with generous headroom.
    act_bytes = C * HW * 4
    wblk_bytes = 2 * C * nine_c * itemsize
    stacked_bytes = 9 * C * HW * itemsize
    est = 4 * act_bytes + 2 * wblk_bytes + 2 * stacked_bytes + 6 * act_bytes
    vmem_limit = int(min(max(4 * est, 16 << 20), 40 << 20))

    out = pl.pallas_call(
        kernel,
        out_shape=jax.ShapeDtypeStruct((N, C, HW), jnp.float32),
        grid=(N, num_blocks),
        in_specs=[
            pl.BlockSpec((1, C, HW), lambda n, blk: (n, 0, 0)),             # per-sample acts
            pl.BlockSpec((1, 2, C, nine_c), lambda n, blk: (blk, 0, 0, 0)),  # stream per block
        ],
        out_specs=pl.BlockSpec((1, C, HW), lambda n, blk: (n, 0, 0)),        # resident over blk
        compiler_params=pltpu.CompilerParams(
            # TODO(synk): on v7x switch the batch axis to pltpu.CORE_PARALLEL (keep N even)
            # so both TensorCores split the batch; plain "parallel" is a no-op there.
            dimension_semantics=("parallel", "arbitrary"),
            vmem_limit_bytes=vmem_limit),
        cost_estimate=cost,
    )(x, w_all)
    return out.reshape(N, C, H, W)


# --------------------------------------------------------------------------- reference

def resblocks_reference(x_nchw, params, *, eps=1e-5, compute_dtype=jnp.bfloat16):
    """Pure-JAX reference with matching numerics (bf16 matmul operands, f32 accum)."""
    def conv(h, w, b):
        out = lax.conv_general_dilated(
            h.astype(compute_dtype), w.astype(compute_dtype),
            window_strides=(1, 1), padding=((1, 1), (1, 1)),
            dimension_numbers=("NCHW", "OIHW", "NCHW"),
            preferred_element_type=jnp.float32)
        return out + b.reshape(1, -1, 1, 1)

    def instance_norm(h):
        mu = jnp.mean(h, axis=(2, 3), keepdims=True)
        hc = h - mu
        var = jnp.mean(hc * hc, axis=(2, 3), keepdims=True)
        return hc * lax.rsqrt(var + eps)

    x = x_nchw
    for (w1, b1, w2, b2) in params:
        residual = x
        h = jnp.maximum(instance_norm(conv(x, w1, b1)), 0.0)
        h = instance_norm(conv(h, w2, b2))
        x = residual + h
    return x


# --------------------------------------------------------------------------- main

if __name__ == "__main__":
    key = jax.random.PRNGKey(0)
    k_x, k_p = jax.random.split(key)

    # batch=2, dim (channels) = 32, spatial 16x16, 2 residual blocks.
    N, C, H, W = 2, 32, 16, 16
    num_blocks = 2
    x = jax.random.normal(k_x, (N, C, H, W), jnp.float32)
    params = init_resblocks_params(k_p, num_blocks=num_blocks, dim=C)

    _ = _roll_sign()   # warm the roll-convention probe outside any jit trace

    fwd = jax.jit(resblocks_forward)
    out = jax.block_until_ready(fwd(x, params))

    assert out.shape == (N, C, H, W), out.shape
    assert bool(jnp.all(jnp.isfinite(out)))

    ref = resblocks_reference(x, params)
    max_err = float(jnp.max(jnp.abs(out - ref)))
    # Both paths use bf16 matmul operands with f32 accumulation; tolerance covers
    # accumulation-order / cast-boundary differences while catching any real bug.
    assert max_err < 4e-2, f"mismatch vs reference: max abs err = {max_err}"

    print("KERNEL_OK")
</pallas_src>

<mosaic_0001>
module attributes {stable_mosaic.version = 11 : i64} {
  func.func @probe(%arg0: memref<8x128xf32, #tpu.memory_space<vmem>>, %arg1: memref<8x128xf32, #tpu.memory_space<vmem>>) attributes {dimension_semantics = [], scalar_prefetch = 0 : i64, scratch_operands = 0 : i64, tpu.core_type = #tpu.core_type<tc>} {
    %c0 = arith.constant 0 : index
    %c0_0 = arith.constant 0 : index
    %0 = vector.load %arg0[%c0, %c0_0] : memref<8x128xf32, #tpu.memory_space<vmem>>, vector<8x128xf32>
    %c1_i32 = arith.constant 1 : i32
    %1 = tpu.dynamic_rotate %0 by %c1_i32 dim 1 : vector<8x128xf32>, i32 -> vector<8x128xf32>
    %c0_1 = arith.constant 0 : index
    %c0_2 = arith.constant 0 : index
    %2 = vector.load %arg1[%c0_1, %c0_2] : memref<8x128xf32, #tpu.memory_space<vmem>>, vector<8x128xf32>
    tpu.vector_store %arg1[%c0_1, %c0_2], %1 {strides = array<i32>} : memref<8x128xf32, #tpu.memory_space<vmem>>, vector<8x128xf32>,
    return
  }
}

</mosaic_0001>

<llo_original>
// kernel: tpu_custom_call.1
$region0: #{tpu_custom_call.1}
  #allocation0 [shape = 'u32[]', space=smem, size = 0x4, offset = 0x4, fixed_abs, tag = 'smem constant byte address 0x4 - core index']
  #allocation1 [shape = 'u32[144,128]{1,0:T(1,128)}', space=vmem, size = 0x12000, scoped, tag = 'internal scratch']
  %s0 = inlined_call_operand.hbm [shape: f32[8,128], index: 0, kind: input, shape index: {}]
  %s1 = inlined_call_operand.hbm [shape: f32[8,128], index: 1, kind: output, shape index: {}]
  %s2 = sld [smem:[#allocation0]]
  $region18: #{tpu_custom_call.1} parent=0
    _
  %s4 = ssub.s32 1, %s2
  %s5 = scalar_select 0, %s4, %s2
  $region1: #{tpu_custom_call.1} parent=0
    #allocation2 [shape = 'u8[4096]{0}', space=vmem, size = 0x1000, scoped, tag = 'input window, operand 0, single buffered']
    #allocation3 [shape = 's32[1]{0}', space=sflag, size = 0x4, scoped, tag = 'scoped memory for tpu_custom_call.1']
    #allocation4 [shape = 's32[1]{0}', space=sflag, size = 0x4, scoped, tag = 'scoped memory for tpu_custom_call.1']
    #allocation5 [shape = 'u8[4096]{0}', space=vmem, size = 0x1000, scoped, tag = 'output window, operand 0, single buffered']
    %6 = vsyncpa [#allocation3], 0
    %7 = vsyncpa [#allocation4], 0
    // Predicated region
    $region2: #{tpu_custom_call.1} parent=1 // pred_check
      _
    $region3: #{tpu_custom_call.1} parent=1 // pred_check_branch
      %9 = sbr.rel (0) target = $region5
    $region4: #{tpu_custom_call.1} parent=1 // pred_region
      %s11 = ssub.s32 128, 128
      %12 = vsyncadd [#allocation3], %s11
      %s14 = sshll.u32 [#allocation2], 4
      %s15 = int_to_ptr.vmem [resolvable:$true] %s14
      %17 = dma.hbm_to_vmem [thread:$0]  %s0, 128, %s15, [#allocation3]
    $region5: #{tpu_custom_call.1} parent=1 // pred_fallthru
      _
    // Predicated region
    $region6: #{tpu_custom_call.1} parent=1 // pred_check
      _
    $region7: #{tpu_custom_call.1} parent=1 // pred_check_branch
      %19 = sbr.rel (0) target = $region9
    $region8: #{tpu_custom_call.1} parent=1 // pred_region
      %20 = dma.done [#allocation3], 128
    $region9: #{tpu_custom_call.1} parent=1 // pred_fallthru
      _
    %v21 = vld [vmem:[#allocation2] sm:$0xff]
    %22 = vrot.lane.b32.xlu0 %v21, 1
    %v23 = vpop.permute.xlu0 %22
    %24 = vst [vmem:[#allocation5] sm:$0xff] %v23
    // Predicated region
    $region10: #{tpu_custom_call.1} parent=1 // pred_check
      _
    $region11: #{tpu_custom_call.1} parent=1 // pred_check_branch
      %26 = sbr.rel (0) target = $region13
    $region12: #{tpu_custom_call.1} parent=1 // pred_region
      %s28 = ssub.s32 128, 128
      %29 = vsyncadd [#allocation4], %s28
      %s31 = sshll.u32 [#allocation5], 4
      %s32 = int_to_ptr.vmem [resolvable:$true] %s31
      %34 = dma.vmem_to_hbm [thread:$0]  %s32, 128, %s1, [#allocation4]
    $region13: #{tpu_custom_call.1} parent=1 // pred_fallthru
      _
    // Predicated region
    $region14: #{tpu_custom_call.1} parent=1 // pred_check
      _
    $region15: #{tpu_custom_call.1} parent=1 // pred_check_branch
      %36 = sbr.rel (0) target = $region17
    $region16: #{tpu_custom_call.1} parent=1 // pred_region
      %37 = dma.done [#allocation4], 128
    $region17: #{tpu_custom_call.1} parent=1 // pred_fallthru
      _
    %38 = vsyncpa [#allocation3], 1
    %39 = vsyncpa [#allocation4], 1

</llo_original>
